<compile_context>
chip_gen: v5e
topology: v5e:2x2
jax: 0.10.0
libtpu: 0.0.40
codegen_flags: <defaults>
</compile_context>

<pallas_src>
import functools

import jax
import jax.numpy as jnp
from jax import lax
from jax.experimental import pallas as pl
from jax.experimental.pallas import tpu as pltpu


def _round_up(a, b):
    return ((a + b - 1) // b) * b


# ----------------------------------------------------------------------------
# Fused path: whole spatial plane (lane axis) in one block, tile over rows.
# ----------------------------------------------------------------------------
def _fused_body(x_ref, p_ref, mask_ref, o_ref, n_valid, eps):
    x = x_ref[...].astype(jnp.float32)                 # (TILE_ROWS, HWp)

    if mask_ref is not None:
        # Padded lane columns contain garbage (no wrapper zero-fill anymore),
        # so select (NaN-safe), don't multiply.
        keep = mask_ref[...] != 0.0                    # (1, HWp), broadcasts
        xm = jnp.where(keep, x, 0.0)
    else:
        xm = x

    # Single pass: sum and sum-of-squares together (no big `diff` temp).
    s = jnp.sum(xm, axis=-1, keepdims=True)            # (TILE_ROWS, 1)
    ss = jnp.sum(xm * xm, axis=-1, keepdims=True)      # (TILE_ROWS, 1)
    mean = s * (1.0 / n_valid)
    # Unbiased variance: (sum(x^2) - N*mean^2) / (N-1); NaN for N==1 (matches torch).
    var = (ss - s * mean) / jnp.float32(n_valid - 1)
    var = jnp.maximum(var, 0.0)                        # guard cancellation; NaN propagates
    std = jnp.sqrt(var)

    w = p_ref[:, 0:1].astype(jnp.float32)
    b = p_ref[:, 1:2].astype(jnp.float32)
    scale = w / (std + eps)                            # one divide per row
    shift = b - mean * scale

    # Recompute from x (already resident in VMEM) instead of keeping `diff`.
    o_ref[...] = (x * scale + shift).astype(o_ref.dtype)


def _ln1_fused_masked_kernel(x_ref, p_ref, mask_ref, o_ref, *, n_valid, eps):
    _fused_body(x_ref, p_ref, mask_ref, o_ref, n_valid, eps)


def _ln1_fused_kernel(x_ref, p_ref, o_ref, *, n_valid, eps):
    _fused_body(x_ref, p_ref, None, o_ref, n_valid, eps)


# ----------------------------------------------------------------------------
# Chunked path (large H*W): kernel A = per-row stats over lane chunks,
# kernel B = apply per-row scale/shift.
# ----------------------------------------------------------------------------
def _ln1_stats_kernel(x_ref, p_ref, scale_ref, shift_ref, s_acc, ss_acc, *,
                      n_valid, chunk, eps, need_mask):
    k = pl.program_id(1)

    @pl.when(k == 0)
    def _():
        s_acc[...] = jnp.zeros_like(s_acc)
        ss_acc[...] = jnp.zeros_like(ss_acc)

    x = x_ref[...].astype(jnp.float32)                 # (TR, CHUNK)
    if need_mask:
        col = lax.broadcasted_iota(jnp.int32, x.shape, 1)
        x = jnp.where(k * chunk + col < n_valid, x, 0.0)

    s_acc[...] += jnp.sum(x, axis=-1, keepdims=True)
    ss_acc[...] += jnp.sum(x * x, axis=-1, keepdims=True)

    @pl.when(k == pl.num_programs(1) - 1)
    def _():
        s = s_acc[...]
        mean = s * (1.0 / n_valid)
        var = (ss_acc[...] - s * mean) / jnp.float32(n_valid - 1)
        var = jnp.maximum(var, 0.0)
        std = jnp.sqrt(var)
        w = p_ref[:, 0:1].astype(jnp.float32)
        b = p_ref[:, 1:2].astype(jnp.float32)
        scale = w / (std + eps)
        scale_ref[...] = scale
        shift_ref[...] = b - mean * scale


def _ln1_apply_kernel(x_ref, scale_ref, shift_ref, o_ref):
    x = x_ref[...].astype(jnp.float32)
    o_ref[...] = (x * scale_ref[...] + shift_ref[...]).astype(o_ref.dtype)


# ----------------------------------------------------------------------------
# Wrapper
# ----------------------------------------------------------------------------
def layer_norm1(x, weight, bias, eps=1e-5, *, block_bytes=4 * 1024 * 1024):
    """x: (B, C, H, W); weight/bias: (C,) or (C, 1, 1)."""
    B, C, H, W = x.shape
    R = B * C
    N = H * W

    x2 = x.reshape(R, N)                               # view; no pad, no copy
    itemsize = x.dtype.itemsize

    # Per-row affine params (row r <-> channel r % C), packed -> one DMA/step.
    w_rows = jnp.tile(weight.reshape(-1).astype(jnp.float32), B)
    b_rows = jnp.tile(bias.reshape(-1).astype(jnp.float32), B)
    params = jnp.stack([w_rows, b_rows], axis=-1)      # (R, 2) f32

    HWp = _round_up(max(N, 128), 128)                  # lane-dense block width
    rows_budget = (block_bytes // (HWp * 4)) // 8 * 8  # rows/block at ~block_bytes (f32)

    if rows_budget >= 8:
        # ---------------- fused single-pass path ----------------
        TILE_ROWS = min(rows_budget, _round_up(R, 8))
        # Keep >= ~8 grid steps when possible (v7x megacore + pipelining).
        TILE_ROWS = min(TILE_ROWS, max(8, _round_up(pl.cdiv(R, 8), 8)))
        grid = (pl.cdiv(R, TILE_ROWS),)

        need_mask = HWp != N
        inputs = [x2, params]
        in_specs = [
            pl.BlockSpec((TILE_ROWS, HWp), lambda i: (i, 0)),
            pl.BlockSpec((TILE_ROWS, 2), lambda i: (i, 0)),
        ]
        if need_mask:
            mask = (jnp.arange(HWp, dtype=jnp.int32) < N).astype(jnp.float32)
            inputs.append(mask.reshape(1, HWp))
            in_specs.append(pl.BlockSpec((1, HWp), lambda i: (0, 0)))  # DMA'd once
            kern = functools.partial(_ln1_fused_masked_kernel, n_valid=N, eps=eps)
        else:
            kern = functools.partial(_ln1_fused_kernel, n_valid=N, eps=eps)

        io_block = TILE_ROWS * HWp * itemsize
        f32_block = TILE_ROWS * HWp * 4
        vmem_need = 2 * (2 * io_block) + 4 * f32_block + (2 << 20)
        vmem_limit = int(min(max(vmem_need, 16 << 20), 48 << 20))

        out2 = pl.pallas_call(
            kern,
            out_shape=jax.ShapeDtypeStruct((R, N), x.dtype),
            grid=grid,
            in_specs=in_specs,
            out_specs=pl.BlockSpec((TILE_ROWS, HWp), lambda i: (i, 0)),
            compiler_params=pltpu.CompilerParams(
                dimension_semantics=("parallel",),
                vmem_limit_bytes=vmem_limit,
            ),
            cost_estimate=pl.CostEstimate(
                flops=8 * R * N,
                transcendentals=R,
                bytes_accessed=2 * R * N * itemsize,
            ),
        )(*inputs)
        return out2.reshape(B, C, H, W)

    # ---------------- chunked path: tile the lane (H*W) axis ----------------
    TR = 8
    CHUNK = max(128, (block_bytes // (TR * 4)) // 128 * 128)
    CHUNK = min(CHUNK, HWp)
    n_row_blocks = pl.cdiv(R, TR)
    n_chunks = pl.cdiv(N, CHUNK)
    need_mask = (N % CHUNK) != 0

    io_chunk = TR * CHUNK * itemsize
    f32_chunk = TR * CHUNK * 4
    vmem_a = int(min(max(2 * io_chunk + 3 * f32_chunk + (2 << 20), 16 << 20), 48 << 20))
    vmem_b = int(min(max(2 * (2 * io_chunk) + 2 * f32_chunk + (2 << 20), 16 << 20), 48 << 20))

    stats_kernel = functools.partial(
        _ln1_stats_kernel, n_valid=N, chunk=CHUNK, eps=eps, need_mask=need_mask)

    scale_rows, shift_rows = pl.pallas_call(
        stats_kernel,
        out_shape=(jax.ShapeDtypeStruct((R, 1), jnp.float32),
                   jax.ShapeDtypeStruct((R, 1), jnp.float32)),
        grid=(n_row_blocks, n_chunks),
        in_specs=[
            pl.BlockSpec((TR, CHUNK), lambda i, k: (i, k)),
            pl.BlockSpec((TR, 2), lambda i, k: (i, 0)),
        ],
        out_specs=(
            pl.BlockSpec((TR, 1), lambda i, k: (i, 0)),
            pl.BlockSpec((TR, 1), lambda i, k: (i, 0)),
        ),
        scratch_shapes=[
            pltpu.VMEM((TR, 1), jnp.float32),
            pltpu.VMEM((TR, 1), jnp.float32),
        ],
        compiler_params=pltpu.CompilerParams(
            dimension_semantics=("parallel", "arbitrary"),
            vmem_limit_bytes=vmem_a,
        ),
    )(x2, params)

    out2 = pl.pallas_call(
        _ln1_apply_kernel,
        out_shape=jax.ShapeDtypeStruct((R, N), x.dtype),
        grid=(n_row_blocks, n_chunks),
        in_specs=[
            pl.BlockSpec((TR, CHUNK), lambda i, k: (i, k)),
            pl.BlockSpec((TR, 1), lambda i, k: (i, 0)),
            pl.BlockSpec((TR, 1), lambda i, k: (i, 0)),
        ],
        out_specs=pl.BlockSpec((TR, CHUNK), lambda i, k: (i, k)),
        compiler_params=pltpu.CompilerParams(
            dimension_semantics=("parallel", "parallel"),
            vmem_limit_bytes=vmem_b,
        ),
    )(x2, scale_rows, shift_rows)
    return out2.reshape(B, C, H, W)


# ----------------------------------------------------------------------------
# Reference + tests
# ----------------------------------------------------------------------------
def _reference(x, weight, bias, eps=1e-5):
    xf = x.astype(jnp.float32)
    mean = jnp.mean(xf, axis=(2, 3), keepdims=True)
    std = jnp.sqrt(jnp.var(xf, axis=(2, 3), keepdims=True, ddof=1))  # unbiased
    w = weight.reshape(1, -1, 1, 1).astype(jnp.float32)
    b = bias.reshape(1, -1, 1, 1).astype(jnp.float32)
    return (w * (xf - mean) / (std + eps) + b).astype(x.dtype)


if __name__ == "__main__":
    key = jax.random.PRNGKey(0)
    keys = jax.random.split(key, 10)

    def check(name, x, w, b, **kw):
        out = jax.block_until_ready(layer_norm1(x, w, b, eps=1e-5, **kw))
        ref = _reference(x, w, b, eps=1e-5)
        if not jnp.allclose(out, ref, atol=2e-5, rtol=2e-5):
            err = float(jnp.max(jnp.abs(out - ref)))
            raise AssertionError(f"Pallas LayerNorm1 mismatch ({name}), max abs err {err}")

    # Case 1: H*W multiple of 128 (no lane mask), single row block.
    x1 = jax.random.normal(keys[0], (2, 4, 16, 16), dtype=jnp.float32)
    w1 = jnp.ones((4, 1, 1), dtype=jnp.float32)     # matches nn.Parameter(torch.ones(C,1,1))
    b1 = jnp.zeros((4, 1, 1), dtype=jnp.float32)
    check("no-mask", x1, w1, b1)

    # Case 2: lane mask (H*W=100 -> 128-wide block) + partial row block (6 rows in 8).
    x2 = jax.random.normal(keys[1], (2, 3, 10, 10), dtype=jnp.float32)
    w2 = jax.random.normal(keys[2], (3, 1, 1), dtype=jnp.float32)
    b2 = jax.random.normal(keys[3], (3, 1, 1), dtype=jnp.float32)
    check("lane-mask", x2, w2, b2)

    # Case 3: multi-step row grid (R=15 -> two 8-row blocks), no lane mask.
    x3 = jax.random.normal(keys[4], (3, 5, 16, 24), dtype=jnp.float32)
    w3 = jax.random.normal(keys[5], (5, 1, 1), dtype=jnp.float32)
    b3 = jax.random.normal(keys[6], (5, 1, 1), dtype=jnp.float32)
    check("multi-row-block", x3, w3, b3)

    # Case 4: force the chunked (large-H*W) two-kernel path at a small shape
    # (tiny block budget -> lane-axis tiling with edge-chunk masking).
    x4 = jax.random.normal(keys[7], (2, 3, 17, 19), dtype=jnp.float32)
    w4 = jax.random.normal(keys[8], (3, 1, 1), dtype=jnp.float32)
    b4 = jax.random.normal(keys[9], (3, 1, 1), dtype=jnp.float32)
    check("chunked", x4, w4, b4, block_bytes=1024)

    print("KERNEL_OK")
</pallas_src>

<mosaic_0001>
module attributes {stable_mosaic.version = 11 : i64} {
  func.func @_ln1_fused_kernel(%arg0: i32, %arg1: memref<8x256xf32, #tpu.memory_space<vmem>>, %arg2: memref<8x2xf32, #tpu.memory_space<vmem>>, %arg3: memref<8x256xf32, #tpu.memory_space<vmem>>) attributes {dimension_semantics = [#tpu.dimension_semantics<parallel>], iteration_bounds = array<i64: 1>, scalar_prefetch = 0 : i64, scratch_operands = 0 : i64, tpu.core_type = #tpu.core_type<tc>, window_params = [{transform_indices = @transform_0, window_bounds = array<i64: 8, 256>}, {transform_indices = @transform_1, window_bounds = array<i64: 8, 2>}, {transform_indices = @transform_2, window_bounds = array<i64: 8, 256>}]} {
    %c0 = arith.constant 0 : index
    %c0_0 = arith.constant 0 : index
    %0 = vector.load %arg1[%c0, %c0_0] : memref<8x256xf32, #tpu.memory_space<vmem>>, vector<8x256xf32>
    %cst = arith.constant dense<0.000000e+00> : vector<8xf32>
    %1 = vector.multi_reduction <add>, %0, %cst [1] : vector<8x256xf32> to vector<8xf32>
    %2 = vector.shape_cast %1 : vector<8xf32> to vector<8x1xf32>
    %3 = arith.mulf %0, %0 : vector<8x256xf32>
    %cst_1 = arith.constant dense<0.000000e+00> : vector<8xf32>
    %4 = vector.multi_reduction <add>, %3, %cst_1 [1] : vector<8x256xf32> to vector<8xf32>
    %5 = vector.shape_cast %4 : vector<8xf32> to vector<8x1xf32>
    %cst_2 = arith.constant 3.906250e-03 : f32
    %6 = vector.broadcast %cst_2 : f32 to vector<8x1xf32>
    %7 = arith.mulf %2, %6 : vector<8x1xf32>
    %8 = arith.mulf %2, %7 : vector<8x1xf32>
    %9 = arith.subf %5, %8 : vector<8x1xf32>
    %cst_3 = arith.constant 2.550000e+02 : f32
    %10 = vector.broadcast %cst_3 : f32 to vector<8x1xf32>
    %11 = arith.divf %9, %10 : vector<8x1xf32>
    %cst_4 = arith.constant 0.000000e+00 : f32
    %12 = vector.broadcast %cst_4 : f32 to vector<8x1xf32>
    %13 = arith.maximumf %11, %12 : vector<8x1xf32>
    %14 = math.sqrt %13 : vector<8x1xf32>
    %c0_5 = arith.constant 0 : index
    %c0_6 = arith.constant 0 : index
    %15 = vector.load %arg2[%c0_5, %c0_6] : memref<8x2xf32, #tpu.memory_space<vmem>>, vector<8x1xf32>
    %c0_7 = arith.constant 0 : index
    %c1 = arith.constant 1 : index
    %16 = vector.load %arg2[%c0_7, %c1] : memref<8x2xf32, #tpu.memory_space<vmem>>, vector<8x1xf32>
    %cst_8 = arith.constant 9.99999974E-6 : f32
    %17 = vector.broadcast %cst_8 : f32 to vector<8x1xf32>
    %18 = arith.addf %14, %17 : vector<8x1xf32>
    %19 = arith.divf %15, %18 : vector<8x1xf32>
    %20 = arith.mulf %7, %19 : vector<8x1xf32>
    %21 = arith.subf %16, %20 : vector<8x1xf32>
    %22 = vector.broadcast %19 : vector<8x1xf32> to vector<8x256xf32>
    %23 = arith.mulf %0, %22 : vector<8x256xf32>
    %24 = vector.broadcast %21 : vector<8x1xf32> to vector<8x256xf32>
    %25 = arith.addf %23, %24 : vector<8x256xf32>
    %c0_9 = arith.constant 0 : index
    %c0_10 = arith.constant 0 : index
    %26 = vector.load %arg3[%c0_9, %c0_10] : memref<8x256xf32, #tpu.memory_space<vmem>>, vector<8x256xf32>
    tpu.vector_store %arg3[%c0_9, %c0_10], %25 {strides = array<i32>} : memref<8x256xf32, #tpu.memory_space<vmem>>, vector<8x256xf32>,
    return
  }
  func.func @transform_0(%arg0: i32) -> (i32, i32) {
    %c0_i32 = arith.constant 0 : i32
    %c0_i32_0 = arith.constant 0 : i32
    return %arg0, %c0_i32 : i32, i32
  }
  func.func @transform_1(%arg0: i32) -> (i32, i32) {
    %c0_i32 = arith.constant 0 : i32
    %c0_i32_0 = arith.constant 0 : i32
    return %arg0, %c0_i32 : i32, i32
  }
  func.func @transform_2(%arg0: i32) -> (i32, i32) {
    %c0_i32 = arith.constant 0 : i32
    %c0_i32_0 = arith.constant 0 : i32
    return %arg0, %c0_i32 : i32, i32
  }
}

</mosaic_0001>

<llo_original>
// kernel: tpu_custom_call.1
$region0: #{tpu_custom_call.1}
  #allocation0 [shape = 'u32[]', space=smem, size = 0x4, offset = 0x4, fixed_abs, tag = 'smem constant byte address 0x4 - core index']
  #allocation1 [shape = 'u32[72,128]{1,0:T(1,128)}', space=vmem, size = 0x9000, scoped, tag = 'internal scratch']
  %s0 = inlined_call_operand.hbm [shape: f32[8,256], index: 0, kind: input, shape index: {}]
  %s1 = inlined_call_operand.vmem [shape: f32[8,2], index: 1, kind: input, shape index: {}]
  %s2 = inlined_call_operand.hbm [shape: f32[8,256], index: 2, kind: output, shape index: {}]
  %s3 = sld [smem:[#allocation0]]
  $region22: #{tpu_custom_call.1} parent=0
    _
  %s5 = ssub.s32 1, %s3
  %s6 = scalar_select 0, %s5, %s3
  $region1: #{tpu_custom_call.1} parent=0
    #allocation2 [shape = 'u8[8192]{0}', space=vmem, size = 0x2000, scoped, tag = 'input window, operand 0, single buffered']
    #allocation3 [shape = 's32[1]{0}', space=sflag, size = 0x4, scoped, tag = 'scoped memory for tpu_custom_call.1']
    #allocation4 [shape = 's32[1]{0}', space=sflag, size = 0x4, scoped, tag = 'scoped memory for tpu_custom_call.1']
    #allocation5 [shape = 'u8[8192]{0}', space=vmem, size = 0x2000, scoped, tag = 'output window, operand 0, single buffered']
    %7 = vsyncpa [#allocation3], 0
    %8 = vsyncpa [#allocation4], 0
    // Predicated region
    $region2: #{tpu_custom_call.1} parent=1 // pred_check
      _
    $region3: #{tpu_custom_call.1} parent=1 // pred_check_branch
      %10 = sbr.rel (0) target = $region5
    $region4: #{tpu_custom_call.1} parent=1 // pred_region
      %12 = vsyncadd [#allocation3], 0
      %s14 = sshll.u32 %s0, 4
      %s15 = int_to_ptr.hbm [resolvable:$true] %s14
      %s16 = sshll.u32 [#allocation2], 4
      %s17 = int_to_ptr.vmem [resolvable:$true] %s16
      %19 = dma.hbm_to_vmem [thread:$0]  %s15, 256, %s17, [#allocation3]
    $region5: #{tpu_custom_call.1} parent=1 // pred_fallthru
      _
    // Predicated region
    $region6: #{tpu_custom_call.1} parent=1 // pred_check
      _
    $region7: #{tpu_custom_call.1} parent=1 // pred_check_branch
      %21 = sbr.rel (0) target = $region9
    $region8: #{tpu_custom_call.1} parent=1 // pred_region
      _
    $region9: #{tpu_custom_call.1} parent=1 // pred_fallthru
      _
    // Predicated region
    $region10: #{tpu_custom_call.1} parent=1 // pred_check
      _
    $region11: #{tpu_custom_call.1} parent=1 // pred_check_branch
      %23 = sbr.rel (0) target = $region13
    $region12: #{tpu_custom_call.1} parent=1 // pred_region
      %25 = dma.done [#allocation3], 256
    $region13: #{tpu_custom_call.1} parent=1 // pred_fallthru
      _
    %v26 = vld [vmem:[#allocation2] sm:$0xff]
    %v27 = vld [vmem:[#allocation2 + $0x8] sm:$0xff]
    %v28 = vadd.f32 %v26, %v27
    %29 = vadd.xlane.f32.xlu0 %v28
    %v30 = vpop.xlane.xlu0 %29
    %v31 = vmul.f32 %v26, %v26
    %v32 = vmul.f32 %v27, %v27
    %v33 = vadd.f32 %v31, %v32
    %34 = vadd.xlane.f32.xlu0 %v33
    %v35 = vpop.xlane.xlu0 %34
    %v36 = vmul.f32 %v30, 0.00390625
    %v37 = vmul.f32 %v30, %v36
    %v38 = vsub.f32 %v35, %v37
    %v39 = vrcp.pop 255.0
    %v40 = vmul.f32 255.0, %v39
    %v41 = vsub.f32 1.0, %v40
    %v42 = vmul.f32 %v39, %v41
    %v43 = vadd.f32 %v39, %v42
    %vm44 = vweird.f32 %v39
    %v45 = vsel %vm44, %v39, %v43
    %v46 = vmul.f32 %v38, %v45
    %v47 = vmax.f32 %v46, 0.0
    %v48 = vrsqrt.pop %v47
    %v49 = vmul.f32 %v48, %v47
    %v50 = vmul.f32 %v49, %v48
    %v51 = vmul.f32 0.5, %v50
    %v52 = vsub.f32 1.5, %v51
    %v53 = vmul.f32 %v48, %v52
    %v54 = vmul.f32 %v47, %v53
    %vm55 = vcmp.eq.f32.partialorder %v47, inf
    %v56 = vsel %vm55, %v47, %v54
    %vm57 = vcmp.eq.f32.partialorder %v47, 0.0
    %v58 = vand.u32 %v47, 2147483648
    %v59 = vsel %vm57, %v58, %v56
    %v60 = vld [vmem:[%s1] sm:$0xff]
    %v61 = vadd.f32 %v59, 1e-05
    %v62 = vrcp.pop %v61
    %v63 = vmul.f32 %v61, %v62
    %v64 = vsub.f32 1.0, %v63
    %v65 = vmul.f32 %v62, %v64
    %v66 = vadd.f32 %v62, %v65
    %vm67 = vweird.f32 %v61
    %vm68 = vweird.f32 %v62
    %vm69 = vmor %vm67, %vm68
    %v70 = vsel %vm69, %v62, %v66
    %v71 = vand.u32 2147483647, %v61
    %vm72 = vcmp.eq.f32.partialorder %v71, 8.507059e+37
    %v73 = vand.u32 %v61, 2147483648
    %v74 = vor.u32 1.1754944e-38, %v73
    %v75 = vsel %vm72, %v74, %v70
    %v76 = vmul.f32 %v60, %v75
    %v77 = vmul.f32 %v36, %v76
    %79 = vrot.lane.b32.xlu0 %v77, 1
    %v80 = vpop.permute.xlu0 %79
    %v82 = vsub.f32 %v60, %v80
    %84 = vset.pattern.permute.xlu0 0
    %85 = vperm.xlu0 %84, %v76
    %v86 = vpop.permute.xlu0 %85
    %v88 = vmul.f32 %v26, %v86
    %v89 = vmul.f32 %v27, %v86
    %91 = vset.pattern.permute.xlu0 1
    %92 = vperm.xlu0 %91, %v82
    %v93 = vpop.permute.xlu0 %92
    %v95 = vadd.f32 %v88, %v93
    %v96 = vadd.f32 %v89, %v93
    %97 = vst [vmem:[#allocation5] sm:$0xff] %v95
    %98 = vst [vmem:[#allocation5 + $0x8] sm:$0xff] %v96
    // Predicated region
    $region14: #{tpu_custom_call.1} parent=1 // pred_check
      _
    $region15: #{tpu_custom_call.1} parent=1 // pred_check_branch
      %100 = sbr.rel (0) target = $region17
    $region16: #{tpu_custom_call.1} parent=1 // pred_region
      %102 = vsyncadd [#allocation4], 0
      %s104 = sshll.u32 [#allocation5], 4
      %s105 = int_to_ptr.vmem [resolvable:$true] %s104
      %s106 = sshll.u32 %s2, 4
      %s107 = int_to_ptr.hbm [resolvable:$true] %s106
      %109 = dma.vmem_to_hbm [thread:$0]  %s105, 256, %s107, [#allocation4]
    $region17: #{tpu_custom_call.1} parent=1 // pred_fallthru
      _
    // Predicated region
    $region18: #{tpu_custom_call.1} parent=1 // pred_check
      _
    $region19: #{tpu_custom_call.1} parent=1 // pred_check_branch
      %111 = sbr.rel (0) target = $region21
    $region20: #{tpu_custom_call.1} parent=1 // pred_region
      %113 = dma.done [#allocation4], 256
    $region21: #{tpu_custom_call.1} parent=1 // pred_fallthru
      _
    %114 = vsyncpa [#allocation3], 1
    %115 = vsyncpa [#allocation4], 1

</llo_original>
